<compile_context>
chip_gen: v7x
topology: tpu7x:2x2x1
jax: 0.10.0
libtpu: 0.0.40
codegen_flags: <defaults>
</compile_context>

<pallas_src>
import jax
import jax.numpy as jnp
from jax.experimental import pallas as pl
from jax.experimental.pallas import tpu as pltpu


def _round_up(a: int, b: int) -> int:
    return (a + b - 1) // b * b


def lora_linear_kernel(x_ref,        # (tm, tk)   activation tile
                       w_ref,        # (tk, tn)   frozen linear weight, pre-transposed
                       b_ref,        # (1,  tn)   frozen linear bias
                       down_ref,     # (tk, rank) lora_down weight, pre-transposed
                       up_ref,       # (rank, tn) lora_up weight, pre-transposed & pre-scaled
                       o_ref,        # (tm, tn)   output tile
                       acc_ref,      # (tm, tn)   f32 scratch: base GEMM accumulator
                       down_acc_ref  # (tm, rank) f32 scratch: lora_down accumulator
                       ):
    k = pl.program_id(2)

    @pl.when(k == 0)
    def _init():
        acc_ref[...] = jnp.zeros_like(acc_ref)
        down_acc_ref[...] = jnp.zeros_like(down_acc_ref)

    x = x_ref[...]
    # Base GEMM partial product (MXU, f32 accumulation).
    acc_ref[...] += jnp.dot(x, w_ref[...], preferred_element_type=jnp.float32)
    # LoRA down-projection partial product (tiny K=rank output, cheap).
    down_acc_ref[...] += jnp.dot(x, down_ref[...],
                                 preferred_element_type=jnp.float32)

    @pl.when(k == pl.num_programs(2) - 1)
    def _finalize():
        # alpha/rank is already folded into up_ref, so no epilogue scale.
        lora = jnp.dot(down_acc_ref[...].astype(up_ref.dtype), up_ref[...],
                       preferred_element_type=jnp.float32)
        o_ref[...] = (acc_ref[...] + b_ref[...] + lora).astype(o_ref.dtype)


def lora_linear(x, w_lin, b_lin, w_down, w_up, alpha, rank, *,
                tm=256, tn=256, tk=512):
    """x: (..., in_features) -> (..., out_features).

    w_lin: (out, in), b_lin: (out,), w_down: (rank, in), w_up: (out, rank),
    all in PyTorch convention.  Weights are frozen, so one-time host-side
    preprocessing (transpose + scale fold) is done here, outside the kernel.
    """
    orig_shape = x.shape
    in_f = orig_shape[-1]
    out_f = w_lin.shape[0]
    x2d = x.reshape(-1, in_f)
    M = x2d.shape[0]

    # --- one-time frozen-weight preprocessing (no per-step kernel cost) ----
    w_t = jnp.transpose(w_lin)                       # (in, out)
    down_t = jnp.transpose(w_down)                   # (in, rank)
    scale = jnp.asarray(alpha, jnp.float32) / jnp.float32(rank)
    up_t = (jnp.transpose(w_up).astype(jnp.float32) * scale).astype(w_up.dtype)  # (rank, out)
    b2d = b_lin.reshape(1, out_f)

    # --- tile sizes (clamped to the problem, aligned to (8, 128)) ----------
    tm = min(tm, _round_up(M, 8))
    tn = min(tn, _round_up(out_f, 128))
    if in_f <= tk:
        tk = in_f                                    # single K step, block == full dim

    Mp = _round_up(M, tm)
    Np = _round_up(out_f, tn)
    Kp = _round_up(in_f, tk)

    # --- zero padding so every grid tile is full (padding contributes 0) ---
    if Mp != M or Kp != in_f:
        x2d = jnp.pad(x2d, ((0, Mp - M), (0, Kp - in_f)))
    if Kp != in_f or Np != out_f:
        w_t = jnp.pad(w_t, ((0, Kp - in_f), (0, Np - out_f)))
    if Kp != in_f:
        down_t = jnp.pad(down_t, ((0, Kp - in_f), (0, 0)))
    if Np != out_f:
        b2d = jnp.pad(b2d, ((0, 0), (0, Np - out_f)))
        up_t = jnp.pad(up_t, ((0, 0), (0, Np - out_f)))

    grid = (Mp // tm, Np // tn, Kp // tk)

    grid_spec = pltpu.PrefetchScalarGridSpec(
        num_scalar_prefetch=0,
        grid=grid,
        in_specs=[
            pl.BlockSpec((tm, tk), lambda i, j, k: (i, k)),      # x tile
            pl.BlockSpec((tk, tn), lambda i, j, k: (k, j)),      # W_lin^T tile
            pl.BlockSpec((1, tn), lambda i, j, k: (0, j)),       # bias tile
            pl.BlockSpec((tk, rank), lambda i, j, k: (k, 0)),    # lora_down^T tile
            pl.BlockSpec((rank, tn), lambda i, j, k: (0, j)),    # lora_up^T (pre-scaled)
        ],
        out_specs=pl.BlockSpec((tm, tn), lambda i, j, k: (i, j)),
        scratch_shapes=[
            pltpu.VMEM((tm, tn), jnp.float32),    # base accumulator
            pltpu.VMEM((tm, rank), jnp.float32),  # lora_down accumulator
        ],
    )

    out_padded = pl.pallas_call(
        lora_linear_kernel,
        out_shape=jax.ShapeDtypeStruct((Mp, Np), x.dtype),
        grid_spec=grid_spec,
        compiler_params=pltpu.CompilerParams(
            dimension_semantics=("parallel", "parallel", "arbitrary"),
            # Explicit, conservative budget: works within v7x's 64 MiB VMEM
            # even with double-buffered inputs at the default tile sizes.
            vmem_limit_bytes=32 * 1024 * 1024,
        ),
    )(x2d, w_t, b2d, down_t, up_t)

    out2d = out_padded[:M, :out_f]
    return out2d.reshape(*orig_shape[:-1], out_f)


def reference(x, w_lin, b_lin, w_down, w_up, alpha, rank):
    base = jnp.einsum('...i,oi->...o', x, w_lin) + b_lin
    down = jnp.einsum('...i,ri->...r', x, w_down)
    up = jnp.einsum('...r,or->...o', down, w_up)
    return base + up * (alpha / rank)


if __name__ == "__main__":
    # Small shapes consistent with the module: batch=2, seq=8, hidden=32.
    batch, seq = 2, 8
    in_features, out_features, rank = 32, 32, 8
    alpha = 1.0

    key = jax.random.PRNGKey(0)
    kx, kw, kb, kd, ku = jax.random.split(key, 5)

    x = jax.random.normal(kx, (batch, seq, in_features), jnp.float32)
    # Frozen original linear (out, in) + bias (out,).
    w_lin = jax.random.normal(kw, (out_features, in_features), jnp.float32) * 0.1
    b_lin = jax.random.normal(kb, (out_features,), jnp.float32) * 0.1
    # lora_down: kaiming-uniform-like init; lora_up: the module zero-inits it,
    # but we use small random values so the LoRA path is exercised here.
    w_down = jax.random.uniform(kd, (rank, in_features), jnp.float32, -0.3, 0.3)
    w_up = jax.random.uniform(ku, (out_features, rank), jnp.float32, -0.1, 0.1)
    # TODO(synk): train-time dropout on the LoRA input (nn.Dropout) is not
    # implemented; this kernel is the eval-mode forward (Identity dropout,
    # adapter enabled).

    out = lora_linear(x, w_lin, b_lin, w_down, w_up, alpha, rank)
    out = jax.block_until_ready(out)

    ref = reference(x, w_lin, b_lin, w_down, w_up, alpha, rank)
    assert out.shape == (batch, seq, out_features)
    assert jnp.allclose(out, ref, atol=1e-4, rtol=1e-4), "mismatch vs reference"

    print("KERNEL_OK")
</pallas_src>

<mosaic_0001>
module attributes {stable_mosaic.version = 11 : i64} {
  func.func @lora_linear_kernel(%arg0: i32, %arg1: i32, %arg2: i32, %arg3: memref<16x32xf32, #tpu.memory_space<vmem>>, %arg4: memref<32x128xf32, #tpu.memory_space<vmem>>, %arg5: memref<1x128xf32, #tpu.memory_space<vmem>>, %arg6: memref<32x8xf32, #tpu.memory_space<vmem>>, %arg7: memref<8x128xf32, #tpu.memory_space<vmem>>, %arg8: memref<16x128xf32, #tpu.memory_space<vmem>>, %arg9: memref<16x128xf32, #tpu.memory_space<vmem>>, %arg10: memref<16x8xf32, #tpu.memory_space<vmem>>) attributes {dimension_semantics = [#tpu.dimension_semantics<parallel>, #tpu.dimension_semantics<parallel>, #tpu.dimension_semantics<arbitrary>], iteration_bounds = array<i64: 1, 1, 1>, scalar_prefetch = 0 : i64, scratch_operands = 2 : i64, tpu.core_type = #tpu.core_type<tc>, window_params = [{transform_indices = @transform_0, window_bounds = array<i64: 16, 32>}, {transform_indices = @transform_1, window_bounds = array<i64: 32, 128>}, {transform_indices = @transform_2, window_bounds = array<i64: 1, 128>}, {transform_indices = @transform_3, window_bounds = array<i64: 32, 8>}, {transform_indices = @transform_4, window_bounds = array<i64: 8, 128>}, {transform_indices = @transform_5, window_bounds = array<i64: 16, 128>}]} {
    %c0_i32 = arith.constant 0 : i32
    %0 = arith.cmpi eq, %arg2, %c0_i32 : i32
    %1 = arith.extui %0 : i1 to i32
    %c0_i32_0 = arith.constant 0 : i32
    %2 = arith.cmpi ne, %1, %c0_i32_0 : i32
    scf.if %2 {
      %cst_17 = arith.constant 0.000000e+00 : f32
      %17 = vector.broadcast %cst_17 : f32 to vector<16x128xf32>
      %c0_18 = arith.constant 0 : index
      %c0_19 = arith.constant 0 : index
      %18 = vector.load %arg9[%c0_18, %c0_19] : memref<16x128xf32, #tpu.memory_space<vmem>>, vector<16x128xf32>
      tpu.vector_store %arg9[%c0_18, %c0_19], %17 {strides = array<i32>} : memref<16x128xf32, #tpu.memory_space<vmem>>, vector<16x128xf32>,
      %cst_20 = arith.constant 0.000000e+00 : f32
      %19 = vector.broadcast %cst_20 : f32 to vector<16x8xf32>
      %c0_21 = arith.constant 0 : index
      %c0_22 = arith.constant 0 : index
      %20 = vector.load %arg10[%c0_21, %c0_22] : memref<16x8xf32, #tpu.memory_space<vmem>>, vector<16x8xf32>
      tpu.vector_store %arg10[%c0_21, %c0_22], %19 {strides = array<i32>} : memref<16x8xf32, #tpu.memory_space<vmem>>, vector<16x8xf32>,
    } else {
    }
    %c0 = arith.constant 0 : index
    %c0_1 = arith.constant 0 : index
    %3 = vector.load %arg3[%c0, %c0_1] : memref<16x32xf32, #tpu.memory_space<vmem>>, vector<16x32xf32>
    %c0_2 = arith.constant 0 : index
    %c0_3 = arith.constant 0 : index
    %4 = vector.load %arg9[%c0_2, %c0_3] : memref<16x128xf32, #tpu.memory_space<vmem>>, vector<16x128xf32>
    %c0_4 = arith.constant 0 : index
    %c0_5 = arith.constant 0 : index
    %5 = vector.load %arg4[%c0_4, %c0_5] : memref<32x128xf32, #tpu.memory_space<vmem>>, vector<32x128xf32>
    %cst = arith.constant dense<0.000000e+00> : vector<16x128xf32>
    %6 = tpu.matmul %3, %5, %cst {dimension_numbers = #tpu.dot_dimension_numbers<[1], [0], [0], [1], [0, 0, 1, 1], [], []>} : vector<16x32xf32>, vector<32x128xf32>, vector<16x128xf32> -> vector<16x128xf32>
    %7 = arith.addf %4, %6 : vector<16x128xf32>
    %c0_6 = arith.constant 0 : index
    %c0_7 = arith.constant 0 : index
    %8 = vector.load %arg9[%c0_6, %c0_7] : memref<16x128xf32, #tpu.memory_space<vmem>>, vector<16x128xf32>
    tpu.vector_store %arg9[%c0_6, %c0_7], %7 {strides = array<i32>} : memref<16x128xf32, #tpu.memory_space<vmem>>, vector<16x128xf32>,
    %c0_8 = arith.constant 0 : index
    %c0_9 = arith.constant 0 : index
    %9 = vector.load %arg10[%c0_8, %c0_9] : memref<16x8xf32, #tpu.memory_space<vmem>>, vector<16x8xf32>
    %c0_10 = arith.constant 0 : index
    %c0_11 = arith.constant 0 : index
    %10 = vector.load %arg6[%c0_10, %c0_11] : memref<32x8xf32, #tpu.memory_space<vmem>>, vector<32x8xf32>
    %cst_12 = arith.constant dense<0.000000e+00> : vector<16x8xf32>
    %11 = tpu.matmul %3, %10, %cst_12 {dimension_numbers = #tpu.dot_dimension_numbers<[1], [0], [0], [1], [0, 0, 1, 1], [], []>} : vector<16x32xf32>, vector<32x8xf32>, vector<16x8xf32> -> vector<16x8xf32>
    %12 = arith.addf %9, %11 : vector<16x8xf32>
    %c0_13 = arith.constant 0 : index
    %c0_14 = arith.constant 0 : index
    %13 = vector.load %arg10[%c0_13, %c0_14] : memref<16x8xf32, #tpu.memory_space<vmem>>, vector<16x8xf32>
    tpu.vector_store %arg10[%c0_13, %c0_14], %12 {strides = array<i32>} : memref<16x8xf32, #tpu.memory_space<vmem>>, vector<16x8xf32>,
    %c0_i32_15 = arith.constant 0 : i32
    %14 = arith.cmpi eq, %arg2, %c0_i32_15 : i32
    %15 = arith.extui %14 : i1 to i32
    %c0_i32_16 = arith.constant 0 : i32
    %16 = arith.cmpi ne, %15, %c0_i32_16 : i32
    scf.if %16 {
      %c0_17 = arith.constant 0 : index
      %c0_18 = arith.constant 0 : index
      %17 = vector.load %arg10[%c0_17, %c0_18] : memref<16x8xf32, #tpu.memory_space<vmem>>, vector<16x8xf32>
      %c0_19 = arith.constant 0 : index
      %c0_20 = arith.constant 0 : index
      %18 = vector.load %arg7[%c0_19, %c0_20] : memref<8x128xf32, #tpu.memory_space<vmem>>, vector<8x128xf32>
      %cst_21 = arith.constant dense<0.000000e+00> : vector<16x128xf32>
      %19 = tpu.matmul %17, %18, %cst_21 {dimension_numbers = #tpu.dot_dimension_numbers<[1], [0], [0], [1], [0, 0, 1, 1], [], []>} : vector<16x8xf32>, vector<8x128xf32>, vector<16x128xf32> -> vector<16x128xf32>
      %c0_22 = arith.constant 0 : index
      %c0_23 = arith.constant 0 : index
      %20 = vector.load %arg9[%c0_22, %c0_23] : memref<16x128xf32, #tpu.memory_space<vmem>>, vector<16x128xf32>
      %c0_24 = arith.constant 0 : index
      %c0_25 = arith.constant 0 : index
      %21 = vector.load %arg5[%c0_24, %c0_25] : memref<1x128xf32, #tpu.memory_space<vmem>>, vector<1x128xf32>
      %22 = vector.broadcast %21 : vector<1x128xf32> to vector<16x128xf32>
      %23 = arith.addf %20, %22 : vector<16x128xf32>
      %24 = arith.addf %23, %19 : vector<16x128xf32>
      %c0_26 = arith.constant 0 : index
      %c0_27 = arith.constant 0 : index
      %25 = vector.load %arg8[%c0_26, %c0_27] : memref<16x128xf32, #tpu.memory_space<vmem>>, vector<16x128xf32>
      tpu.vector_store %arg8[%c0_26, %c0_27], %24 {strides = array<i32>} : memref<16x128xf32, #tpu.memory_space<vmem>>, vector<16x128xf32>,
    } else {
    }
    return
  }
  func.func @transform_0(%arg0: i32, %arg1: i32, %arg2: i32) -> (i32, i32) {
    %c0_i32 = arith.constant 0 : i32
    return %arg0, %arg2 : i32, i32
  }
  func.func @transform_1(%arg0: i32, %arg1: i32, %arg2: i32) -> (i32, i32) {
    %c0_i32 = arith.constant 0 : i32
    return %arg2, %arg1 : i32, i32
  }
  func.func @transform_2(%arg0: i32, %arg1: i32, %arg2: i32) -> (i32, i32) {
    %c0_i32 = arith.constant 0 : i32
    %c0_i32_0 = arith.constant 0 : i32
    return %c0_i32, %arg1 : i32, i32
  }
  func.func @transform_3(%arg0: i32, %arg1: i32, %arg2: i32) -> (i32, i32) {
    %c0_i32 = arith.constant 0 : i32
    %c0_i32_0 = arith.constant 0 : i32
    return %arg2, %c0_i32 : i32, i32
  }
  func.func @transform_4(%arg0: i32, %arg1: i32, %arg2: i32) -> (i32, i32) {
    %c0_i32 = arith.constant 0 : i32
    %c0_i32_0 = arith.constant 0 : i32
    return %c0_i32, %arg1 : i32, i32
  }
  func.func @transform_5(%arg0: i32, %arg1: i32, %arg2: i32) -> (i32, i32) {
    %c0_i32 = arith.constant 0 : i32
    return %arg0, %arg1 : i32, i32
  }
}

</mosaic_0001>

<llo_original>
// kernel: tpu_custom_call.1
$region0: #{tpu_custom_call.1}
  #allocation0 [shape = 'u32[]', space=smem, size = 0x4, offset = 0x4, fixed_abs, tag = 'smem constant byte address 0x4 - core index']
  #allocation1 [shape = 'u32[144,128]{1,0:T(1,128)}', space=vmem, size = 0x12000, scoped, tag = 'internal scratch']
  #allocation2 [shape = 'f32[16,128]{1,0:T(8,128)}', space=vmem, size = 0x2000, scoped, tag = 'scratch operand']
  #allocation3 [shape = 'f32[16,8]{1,0:T(8,128)}', space=vmem, size = 0x2000, scoped, tag = 'scratch operand']
  %s0 = inlined_call_operand.hbm [shape: f32[16,32], index: 0, kind: input, shape index: {}]
  %s1 = inlined_call_operand.vmem [shape: f32[32,128], index: 1, kind: input, shape index: {}]
  %s2 = inlined_call_operand.vmem [shape: f32[1,128], index: 2, kind: input, shape index: {}]
  %s3 = inlined_call_operand.vmem [shape: f32[32,8], index: 3, kind: input, shape index: {}]
  %s4 = inlined_call_operand.vmem [shape: f32[8,128], index: 4, kind: input, shape index: {}]
  %s5 = inlined_call_operand.hbm [shape: f32[16,128], index: 5, kind: output, shape index: {}]
  %s6 = sld [smem:[#allocation0]]
  $region42: #{tpu_custom_call.1} parent=0
    _
  %s8 = ssub.s32 1, %s6
  %s9 = scalar_select 0, %s8, %s6
  $region1: #{tpu_custom_call.1} parent=0
    #allocation4 [shape = 'u8[8192]{0}', space=vmem, size = 0x2000, scoped, tag = 'input window, operand 0, single buffered']
    #allocation5 [shape = 's32[1]{0}', space=sflag, size = 0x4, scoped, tag = 'scoped memory for tpu_custom_call.1']
    #allocation6 [shape = 's32[1]{0}', space=sflag, size = 0x4, scoped, tag = 'scoped memory for tpu_custom_call.1']
    #allocation7 [shape = 'u8[8192]{0}', space=vmem, size = 0x2000, scoped, tag = 'output window, operand 0, single buffered']
    %10 = vsyncpa [#allocation5], 0
    %11 = vsyncpa [#allocation6], 0
    // Predicated region
    $region2: #{tpu_custom_call.1} parent=1 // pred_check
      _
    $region3: #{tpu_custom_call.1} parent=1 // pred_check_branch
      %13 = sbr.rel (0) target = $region5
    $region4: #{tpu_custom_call.1} parent=1 // pred_region
      %s15 = ssub.s32 256, 256
      %16 = vsyncadd [#allocation5], %s15
      %s17 = sshll.u32 [#allocation4], 4
      %s18 = int_to_ptr.vmem [resolvable:$true] %s17
      %23 = dma.hbm_to_vmem [thread:$0]  %s0, 256, %s18, [#allocation5], 128, 128, 8
    $region5: #{tpu_custom_call.1} parent=1 // pred_fallthru
      _
    // Predicated region
    $region6: #{tpu_custom_call.1} parent=1 // pred_check
      _
    $region7: #{tpu_custom_call.1} parent=1 // pred_check_branch
      %25 = sbr.rel (0) target = $region9
    $region8: #{tpu_custom_call.1} parent=1 // pred_region
      _
    $region9: #{tpu_custom_call.1} parent=1 // pred_fallthru
      _
    // Predicated region
    $region10: #{tpu_custom_call.1} parent=1 // pred_check
      _
    $region11: #{tpu_custom_call.1} parent=1 // pred_check_branch
      %27 = sbr.rel (0) target = $region13
    $region12: #{tpu_custom_call.1} parent=1 // pred_region
      _
    $region13: #{tpu_custom_call.1} parent=1 // pred_fallthru
      _
    // Predicated region
    $region14: #{tpu_custom_call.1} parent=1 // pred_check
      _
    $region15: #{tpu_custom_call.1} parent=1 // pred_check_branch
      %29 = sbr.rel (0) target = $region17
    $region16: #{tpu_custom_call.1} parent=1 // pred_region
      _
    $region17: #{tpu_custom_call.1} parent=1 // pred_fallthru
      _
    // Predicated region
    $region18: #{tpu_custom_call.1} parent=1 // pred_check
      _
    $region19: #{tpu_custom_call.1} parent=1 // pred_check_branch
      %31 = sbr.rel (0) target = $region21
    $region20: #{tpu_custom_call.1} parent=1 // pred_region
      _
    $region21: #{tpu_custom_call.1} parent=1 // pred_fallthru
      _
    // Predicated region
    $region22: #{tpu_custom_call.1} parent=1 // pred_check
      _
    $region23: #{tpu_custom_call.1} parent=1 // pred_check_branch
      %33 = sbr.rel (0) target = $region25
    $region24: #{tpu_custom_call.1} parent=1 // pred_region
      %34 = dma.done [#allocation5], 256
    $region25: #{tpu_custom_call.1} parent=1 // pred_fallthru
      _
    %p35 = scmp.eq.s32.totalorder 0, 0
    // Predicated region
    $region26: #{tpu_custom_call.1} parent=1 // pred_check
      %p36 = pneg %p35
    $region27: #{tpu_custom_call.1} parent=1 // pred_check_branch
      %38 = sbr.rel (%p36) target = $region29
    $region28: #{tpu_custom_call.1} parent=1 // pred_region
      %39 = vst [vmem:[#allocation2] sm:$0xff] 0.0
      %40 = vst [vmem:[#allocation2 + $0x8] sm:$0xff] 0.0
      %vm41 = vcmask 64512
      %42 = vst.msk [vmem:[#allocation3] sm:$0xff] %vm41, 0.0
      %43 = vst.msk [vmem:[#allocation3 + $0x8] sm:$0xff] %vm41, 0.0
    $region29: #{tpu_custom_call.1} parent=1 // pred_fallthru
      _
    %v44 = vld [vmem:[#allocation4] sm:$0xff]
    %v45 = vld [vmem:[#allocation4 + $0x8] sm:$0xff]
    %v46 = vld [vmem:[#allocation2] sm:$0xff]
    %v47 = vld [vmem:[#allocation2 + $0x8] sm:$0xff]
    %v48 = vld [vmem:[%s1] sm:$0xff]
    %v49 = vld [vmem:[%s1 + $0x8] sm:$0xff]
    %v50 = vld [vmem:[%s1 + $0x10] sm:$0xff]
    %v51 = vld [vmem:[%s1 + $0x18] sm:$0xff]
    %vm52 = vcmask 261120
    %v54 = vsel %vm52, %v44, 0
    %v57 = vsel %vm52, %v45, 0
    %59 = vmatprep.subr.mxu0 0.0
    %60 = vmatpush1.msra.mxu0 %v48
    %61 = vmatprep.subr.mxu0 0.0
    %62 = vmatpush1.msra.mxu0 %v49
    %63 = vmatprep.subr.mxu0 0.0
    %64 = vmatpush1.msra.mxu0 %v50
    %65 = vmatprep.subr.mxu0 0.0
    %66 = vmatpush1.msra.mxu0 %v51
    %67 = vmatprep.subr.mxu0 0.0
    %68 = vmatpush1.msra.mxu0 0.0
    %69 = vmatprep.subr.mxu0 0.0
    %70 = vmatpush1.msra.mxu0 0.0
    %71 = vmatprep.subr.mxu0 0.0
    %72 = vmatpush1.msra.mxu0 0.0
    %73 = vmatprep.subr.mxu0 0.0
    %74 = vmatpush1.msra.mxu0 0.0
    %75 = vmatprep.subr.mxu0 0.0
    %76 = vmatpush1.msra.mxu0 0.0
    %77 = vmatprep.subr.mxu0 0.0
    %78 = vmatpush1.msra.mxu0 0.0
    %79 = vmatprep.subr.mxu0 0.0
    %80 = vmatpush1.msra.mxu0 0.0
    %81 = vmatprep.subr.mxu0 0.0
    %82 = vmatpush1.msra.mxu0 0.0
    %83 = vmatprep.subr.mxu0 0.0
    %84 = vmatpush1.msra.mxu0 0.0
    %85 = vmatprep.subr.mxu0 0.0
    %86 = vmatpush1.msra.mxu0 0.0
    %87 = vmatprep.subr.mxu0 0.0
    %88 = vmatpush1.msra.mxu0 0.0
    %89 = vmatprep.subr.mxu0 0.0
    %90 = vmatpush1.msra.mxu0 0.0
    %91 = vmatprep.subr.mxu0 0.0
    %92 = vmatpush1.msra.mxu0 0.0
    %93 = vmatprep.subr.mxu0 0.0
    %94 = vmatpush1.msra.mxu0 0.0
    %95 = vmatprep.subr.mxu0 0.0
    %96 = vmatpush1.msra.mxu0 0.0
    %97 = vmatprep.subr.mxu0 0.0
    %98 = vmatpush1.msra.mxu0 0.0
    %99 = vmatprep.subr.mxu0 0.0
    %100 = vmatpush1.msra.mxu0 0.0
    %101 = vmatprep.subr.mxu0 0.0
    %102 = vmatpush1.msra.mxu0 0.0
    %103 = vmatprep.subr.mxu0 0.0
    %104 = vmatpush1.msra.mxu0 0.0
    %105 = vmatprep.subr.mxu0 0.0
    %106 = vmatpush1.msra.mxu0 0.0
    %107 = vmatprep.subr.mxu0 0.0
    %108 = vmatpush1.msra.mxu0 0.0
    %109 = vmatprep.subr.mxu0 0.0
    %110 = vmatpush1.msra.mxu0 0.0
    %111 = vmatprep.subr.mxu0 0.0
    %112 = vmatpush1.msra.mxu0 0.0
    %113 = vmatprep.subr.mxu0 0.0
    %114 = vmatpush1.msra.mxu0 0.0
    %115 = vmatprep.subr.mxu0 0.0
    %116 = vmatpush1.msra.mxu0 0.0
    %117 = vmatprep.subr.mxu0 0.0
    %118 = vmatpush1.msra.mxu0 0.0
    %119 = vmatprep.subr.mxu0 0.0
    %120 = vmatpush1.msra.mxu0 0.0
    %121 = vmatprep.subr.mxu0 0.0
    %122 = vmatpush1.msra.mxu0 0.0
    %123 = vmatprep.mubr.f32.mxu0 0.0
    %124 = vmatmul.mubr.f32.gmra.mrb[0].mxu0 %v54
    %v125 = vpop.f32.mrb[0].mxu0
    %v126 = vadd.f32 0.0, %v125
    %v127 = vpop.f32.mrb[0].mxu0
    %128 = vmatprep.mubr.f32.mxu0 0.0
    %129 = vmatmul.mubr.f32.gmra.mrb[0].mxu0 %v57
    %v130 = vpop.f32.mrb[0].mxu0
    %v131 = vadd.f32 0.0, %v130
    %v132 = vpop.f32.mrb[0].mxu0
    %133 = vdwg.mxu0
    %v134 = vadd.f32 %v46, %v126
    %v135 = vadd.f32 %v47, %v131
    %136 = vst [vmem:[#allocation2] sm:$0xff] %v134
    %137 = vst [vmem:[#allocation2 + $0x8] sm:$0xff] %v135
    %v138 = vld [vmem:[#allocation3] sm:$0xff]
    %v139 = vld [vmem:[#allocation3 + $0x8] sm:$0xff]
    %v140 = vld [vmem:[%s3] sm:$0xff]
    %v141 = vld [vmem:[%s3 + $0x8] sm:$0xff]
    %v142 = vld [vmem:[%s3 + $0x10] sm:$0xff]
    %v143 = vld [vmem:[%s3 + $0x18] sm:$0xff]
    %144 = vmatprep.subr.mxu0 0.0
    %145 = vmatpush1.msra.mxu0 %v140
    %146 = vmatprep.subr.mxu0 0.0
    %147 = vmatpush1.msra.mxu0 %v141
    %148 = vmatprep.subr.mxu0 0.0
    %149 = vmatpush1.msra.mxu0 %v142
    %150 = vmatprep.subr.mxu0 0.0
    %151 = vmatpush1.msra.mxu0 %v143
    %152 = vmatprep.subr.mxu0 0.0
    %153 = vmatpush1.msra.mxu0 0.0
    %154 = vmatprep.subr.mxu0 0.0
    %155 = vmatpush1.msra.mxu0 0.0
    %156 = vmatprep.subr.mxu0 0.0
    %157 = vmatpush1.msra.mxu0 0.0
    %158 = vmatprep.subr.mxu0 0.0
    %159 = vmatpush1.msra.mxu0 0.0
    %160 = vmatprep.subr.mxu0 0.0
    %161 = vmatpush1.msra.mxu0 0.0
    %162 = vmatprep.subr.mxu0 0.0
    %163 = vmatpush1.msra.mxu0 0.0
    %164 = vmatprep.subr.mxu0 0.0
    %165 = vmatpush1.msra.mxu0 0.0
    %166 = vmatprep.subr.mxu0 0.0
    %167 = vmatpush1.msra.mxu0 0.0
    %168 = vmatprep.subr.mxu0 0.0
    %169 = vmatpush1.msra.mxu0 0.0
    %170 = vmatprep.subr.mxu0 0.0
    %171 = vmatpush1.msra.mxu0 0.0
    %172 = vmatprep.subr.mxu0 0.0
    %173 = vmatpush1.msra.mxu0 0.0
    %174 = vmatprep.subr.mxu0 0.0
    %175 = vmatpush1.msra.mxu0 0.0
    %176 = vmatprep.subr.mxu0 0.0
    %177 = vmatpush1.msra.mxu0 0.0
    %178 = vmatprep.subr.mxu0 0.0
    %179 = vmatpush1.msra.mxu0 0.0
    %180 = vmatprep.subr.mxu0 0.0
    %181 = vmatpush1.msra.mxu0 0.0
    %182 = vmatprep.subr.mxu0 0.0
    %183 = vmatpush1.msra.mxu0 0.0
    %184 = vmatprep.subr.mxu0 0.0
    %185 = vmatpush1.msra.mxu0 0.0
    %186 = vmatprep.subr.mxu0 0.0
    %187 = vmatpush1.msra.mxu0 0.0
    %188 = vmatprep.subr.mxu0 0.0
    %189 = vmatpush1.msra.mxu0 0.0
    %190 = vmatprep.subr.mxu0 0.0
    %191 = vmatpush1.msra.mxu0 0.0
    %192 = vmatprep.subr.mxu0 0.0
    %193 = vmatpush1.msra.mxu0 0.0
    %194 = vmatprep.subr.mxu0 0.0
    %195 = vmatpush1.msra.mxu0 0.0
    %196 = vmatprep.subr.mxu0 0.0
    %197 = vmatpush1.msra.mxu0 0.0
    %198 = vmatprep.subr.mxu0 0.0
    %199 = vmatpush1.msra.mxu0 0.0
    %200 = vmatprep.subr.mxu0 0.0
    %201 = vmatpush1.msra.mxu0 0.0
    %202 = vmatprep.subr.mxu0 0.0
    %203 = vmatpush1.msra.mxu0 0.0
    %204 = vmatprep.subr.mxu0 0.0
    %205 = vmatpush1.msra.mxu0 0.0
    %206 = vmatprep.subr.mxu0 0.0
    %207 = vmatpush1.msra.mxu0 0.0
    %208 = vmatprep.mubr.f32.mxu0 0.0
    %209 = vmatmul.mubr.f32.gmra.mrb[0].mxu0 %v54
    %v210 = vpop.f32.mrb[0].mxu0
    %v211 = vadd.f32 0.0, %v210
    %v212 = vpop.f32.mrb[0].mxu0
    %213 = vmatprep.mubr.f32.mxu0 0.0
    %214 = vmatmul.mubr.f32.gmra.mrb[0].mxu0 %v57
    %v215 = vpop.f32.mrb[0].mxu0
    %v216 = vadd.f32 0.0, %v215
    %v217 = vpop.f32.mrb[0].mxu0
    %218 = vdwg.mxu0
    %v219 = vadd.f32 %v138, %v211
    %v220 = vadd.f32 %v139, %v216
    %vm221 = vcmask 64512
    %222 = vst.msk [vmem:[#allocation3] sm:$0xff] %vm221, %v219
    %223 = vst.msk [vmem:[#allocation3 + $0x8] sm:$0xff] %vm221, %v220
    // Predicated region
    $region30: #{tpu_custom_call.1} parent=1 // pred_check
      %p224 = pneg %p35
    $region31: #{tpu_custom_call.1} parent=1 // pred_check_branch
      %226 = sbr.rel (%p224) target = $region33
    $region32: #{tpu_custom_call.1} parent=1 // pred_region
      %v227 = vld [vmem:[#allocation3] sm:$0xff]
      %v228 = vld [vmem:[#allocation3 + $0x8] sm:$0xff]
      %v229 = vld [vmem:[%s4] sm:$0xff]
      %v231 = vsel %vm221, %v227, 0
      %v234 = vsel %vm221, %v228, 0
      %236 = vmatprep.subr.mxu0 0.0
      %237 = vmatpush1.msra.mxu0 %v229
      %238 = vmatprep.subr.mxu0 0.0
      %239 = vmatpush1.msra.mxu0 0.0
      %240 = vmatprep.subr.mxu0 0.0
      %241 = vmatpush1.msra.mxu0 0.0
      %242 = vmatprep.subr.mxu0 0.0
      %243 = vmatpush1.msra.mxu0 0.0
      %244 = vmatprep.subr.mxu0 0.0
      %245 = vmatpush1.msra.mxu0 0.0
      %246 = vmatprep.subr.mxu0 0.0
      %247 = vmatpush1.msra.mxu0 0.0
      %248 = vmatprep.subr.mxu0 0.0
      %249 = vmatpush1.msra.mxu0 0.0
      %250 = vmatprep.subr.mxu0 0.0
      %251 = vmatpush1.msra.mxu0 0.0
      %252 = vmatprep.subr.mxu0 0.0
      %253 = vmatpush1.msra.mxu0 0.0
      %254 = vmatprep.subr.mxu0 0.0
      %255 = vmatpush1.msra.mxu0 0.0
      %256 = vmatprep.subr.mxu0 0.0
      %257 = vmatpush1.msra.mxu0 0.0
      %258 = vmatprep.subr.mxu0 0.0
      %259 = vmatpush1.msra.mxu0 0.0
      %260 = vmatprep.subr.mxu0 0.0
      %261 = vmatpush1.msra.mxu0 0.0
      %262 = vmatprep.subr.mxu0 0.0
      %263 = vmatpush1.msra.mxu0 0.0
      %264 = vmatprep.subr.mxu0 0.0
      %265 = vmatpush1.msra.mxu0 0.0
      %266 = vmatprep.subr.mxu0 0.0
      %267 = vmatpush1.msra.mxu0 0.0
      %268 = vmatprep.subr.mxu0 0.0
      %269 = vmatpush1.msra.mxu0 0.0
      %270 = vmatprep.subr.mxu0 0.0
      %271 = vmatpush1.msra.mxu0 0.0
      %272 = vmatprep.subr.mxu0 0.0
      %273 = vmatpush1.msra.mxu0 0.0
      %274 = vmatprep.subr.mxu0 0.0
      %275 = vmatpush1.msra.mxu0 0.0
      %276 = vmatprep.subr.mxu0 0.0
      %277 = vmatpush1.msra.mxu0 0.0
      %278 = vmatprep.subr.mxu0 0.0
      %279 = vmatpush1.msra.mxu0 0.0
      %280 = vmatprep.subr.mxu0 0.0
      %281 = vmatpush1.msra.mxu0 0.0
      %282 = vmatprep.subr.mxu0 0.0
      %283 = vmatpush1.msra.mxu0 0.0
      %284 = vmatprep.subr.mxu0 0.0
      %285 = vmatpush1.msra.mxu0 0.0
      %286 = vmatprep.subr.mxu0 0.0
      %287 = vmatpush1.msra.mxu0 0.0
      %288 = vmatprep.subr.mxu0 0.0
      %289 = vmatpush1.msra.mxu0 0.0
      %290 = vmatprep.subr.mxu0 0.0
      %291 = vmatpush1.msra.mxu0 0.0
      %292 = vmatprep.subr.mxu0 0.0
      %293 = vmatpush1.msra.mxu0 0.0
      %294 = vmatprep.subr.mxu0 0.0
      %295 = vmatpush1.msra.mxu0 0.0
      %296 = vmatprep.subr.mxu0 0.0
      %297 = vmatpush1.msra.mxu0 0.0
      %298 = vmatprep.subr.mxu0 0.0
      %299 = vmatpush1.msra.mxu0 0.0
      %300 = vmatprep.mubr.f32.mxu0 0.0
      %301 = vmatmul.mubr.f32.gmra.mrb[0].mxu0 %v231
      %v302 = vpop.f32.mrb[0].mxu0
      %v303 = vadd.f32 0.0, %v302
      %v304 = vpop.f32.mrb[0].mxu0
      %305 = vmatprep.mubr.f32.mxu0 0.0
      %306 = vmatmul.mubr.f32.gmra.mrb[0].mxu0 %v234
      %v307 = vpop.f32.mrb[0].mxu0
      %v308 = vadd.f32 0.0, %v307
      %v309 = vpop.f32.mrb[0].mxu0
      %310 = vdwg.mxu0
      %v311 = vld [vmem:[#allocation2] sm:$0xff]
      %v312 = vld [vmem:[#allocation2 + $0x8] sm:$0xff]
      %v313 = vld [vmem:[%s2] sm:$0x1]
      %v315 = vlaneseq
      %v316 = vshrl.u32 %v315, 7
      %v317 = vsub.s32 0, %v316
      %v318 = vrot.slane %v313, %v317
      %v320 = vadd.f32 %v311, %v318
      %v321 = vadd.f32 %v312, %v318
      %v322 = vadd.f32 %v320, %v303
      %v323 = vadd.f32 %v321, %v308
      %324 = vst [vmem:[#allocation7] sm:$0xff] %v322
      %325 = vst [vmem:[#allocation7 + $0x8] sm:$0xff] %v323
    $region33: #{tpu_custom_call.1} parent=1 // pred_fallthru
      _
    // Predicated region
    $region34: #{tpu_custom_call.1} parent=1 // pred_check
      _
    $region35: #{tpu_custom_call.1} parent=1 // pred_check_branch
      %327 = sbr.rel (0) target = $region37
    $region36: #{tpu_custom_call.1} parent=1 // pred_region
      %s329 = ssub.s32 256, 256
      %330 = vsyncadd [#allocation6], %s329
      %s331 = sshll.u32 [#allocation7], 4
      %s332 = int_to_ptr.vmem [resolvable:$true] %s331
      %337 = dma.vmem_to_hbm [thread:$0]  %s332, 256, %s5, [#allocation6], 128, 128, 8
    $region37: #{tpu_custom_call.1} parent=1 // pred_fallthru
      _
    // Predicated region
    $region38: #{tpu_custom_call.1} parent=1 // pred_check
      _
    $region39: #{tpu_custom_call.1} parent=1 // pred_check_branch
      %339 = sbr.rel (0) target = $region41
    $region40: #{tpu_custom_call.1} parent=1 // pred_region
      %340 = dma.done [#allocation6], 256
    $region41: #{tpu_custom_call.1} parent=1 // pred_fallthru
      _
    %341 = vsyncpa [#allocation5], 1
    %342 = vsyncpa [#allocation6], 1

</llo_original>
